<compile_context>
chip_gen: v5e
topology: v5e:2x2
jax: 0.10.0
libtpu: 0.0.40
codegen_flags: <defaults>
</compile_context>

<pallas_src>
import math

import jax
import jax.numpy as jnp
from jax import lax
from jax.experimental import pallas as pl
from jax.experimental.pallas import tpu as pltpu

H = 128            # hidden size (lane aligned)
F = 128            # FFN inner size


def _mcc_kernel(x_ref, msk_ref, q_ref, mv_ref, m_ref, wkv_ref, wo_ref,
                w1_ref, w2c_ref, wc_ref, sc_ref, out_ref):
    # x_ref   : (CT*L, Hd)  bf16   cluster tokens of CT clusters
    # msk_ref : (1, CT*L)   f32    token validity (0/1) for those tokens
    # q_ref   : (1, Hd)     bf16   mention query row, pre-scaled by 1/sqrt(H)
    # mv_ref  : (1, Hd)     f32    mention value row (mention @ Wv)
    # m_ref   : (1, Hd)     f32    mention hidden state (residual stream)
    # sc_ref  : (2,)        f32    SMEM scalars: [score(q, mention-key), head bias]
    # out_ref : (1, 1, CT)  f32    lane-dense logit row for this step
    bf16 = jnp.bfloat16
    CT = out_ref.shape[-1]
    TL, Hd = x_ref.shape
    L = TL // CT

    x = x_ref[...]                                                     # (CT*L, Hd) bf16
    kv = jnp.dot(x, wkv_ref[...], preferred_element_type=jnp.float32)  # (CT*L, 2Hd) f32
    k = kv[:, :Hd]
    v = kv[:, Hd:]

    # Single (pre-scaled) CLS query row against every cluster-token key.
    s_row = lax.dot_general(q_ref[...], k.astype(bf16),
                            (((1,), (1,)), ((), ())),
                            preferred_element_type=jnp.float32)        # (1, CT*L)

    # Block-diagonal mask built in-kernel: token column j belongs to cluster
    # j // L and must be a valid (non-padded) token.
    row = lax.broadcasted_iota(jnp.int32, (CT, TL), 0)
    col = lax.broadcasted_iota(jnp.int32, (CT, TL), 1)
    lo = row * L
    keep = (col >= lo) & (col < lo + L) & (msk_ref[...] > 0.0)
    scores = jnp.where(keep, s_row, -1e9)                              # (CT, CT*L) f32

    # Online-softmax over [CLS key] ++ [this cluster's token keys] (all in f32).
    s_cls = sc_ref[0]                                                  # scalar
    m = jnp.maximum(jnp.max(scores, axis=-1, keepdims=True), s_cls)    # (CT, 1)
    p = jnp.exp(scores - m)                        # masked entries underflow to 0
    p_cls = jnp.exp(s_cls - m)                                         # (CT, 1)
    denom = jnp.sum(p, axis=-1, keepdims=True) + p_cls

    ctx = jnp.dot(p.astype(bf16), v.astype(bf16),
                  preferred_element_type=jnp.float32)                  # (CT, Hd)
    ctx = (ctx + p_cls * mv_ref[...]) * pl.reciprocal(denom, approx=True)

    h = jnp.dot(ctx.astype(bf16), wo_ref[...],
                preferred_element_type=jnp.float32) + m_ref[...]       # (CT, Hd) f32
    ff = jax.nn.gelu(jnp.dot(h.astype(bf16), w1_ref[...],
                             preferred_element_type=jnp.float32),
                     approximate=True)                                 # (CT, F) f32

    # Head with W2 folded in: logits = gelu(h@W1) @ (W2@Wc) + h @ Wc + bc.
    logit = (lax.dot_general(w2c_ref[...], ff.astype(bf16),
                             (((1,), (1,)), ((), ())),
                             preferred_element_type=jnp.float32)
             + lax.dot_general(wc_ref[...], h.astype(bf16),
                               (((1,), (1,)), ((), ())),
                               preferred_element_type=jnp.float32)
             + sc_ref[1])
    out_ref[0] = logit                                                 # (1, CT)


def mention_cluster_classifier(mention_hidden_states, cluster_hidden_states,
                               attention_mask, params, labels=None,
                               cluster_tile=None):
    """Mirrors MentionClusterClassifier.forward; returns (loss, logits)."""
    C, L, Hd = cluster_hidden_states.shape
    wq, wk, wv, wo, w1, w2, wc, bc = params
    bf16 = jnp.bfloat16
    inv_sqrt_h = 1.0 / math.sqrt(Hd)

    # Weights (bf16 for the MXU; f32 accumulation inside the kernel).
    wkv = jnp.concatenate([wk, wv], axis=1).astype(bf16)               # (Hd, 2Hd)
    wo_b = wo.astype(bf16)
    w1_b = w1.astype(bf16)
    wc_row = wc.T.astype(bf16)                                         # (1, Hd)
    w2c_row = jnp.dot(w2.astype(bf16), wc.astype(bf16),                # W2 folded into head
                      preferred_element_type=jnp.float32).T.astype(bf16)   # (1, F)

    # Step-invariant mention (CLS) precomputation: query, key-score, value.
    m_b = mention_hidden_states.astype(bf16)
    q_row = (jnp.dot(m_b, wq.astype(bf16), preferred_element_type=jnp.float32)
             * inv_sqrt_h)                                             # (1, Hd) f32, pre-scaled
    m_kv = jnp.dot(m_b, wkv, preferred_element_type=jnp.float32)       # (1, 2Hd)
    m_k, m_v = m_kv[:, :Hd], m_kv[:, Hd:]
    s_cls = jnp.sum(q_row * m_k)                                       # CLS-key score
    scalars = jnp.stack([s_cls, bc[0]]).astype(jnp.float32)            # SMEM (2,)

    # Cluster tile: multiple of 8 (keeps (8,128) tiling legal for any L),
    # capped at 128 so large C still yields >= 2 parallel grid steps (v7x).
    if cluster_tile is not None:
        CT = int(cluster_tile)
    else:
        CT = min(128, ((C + 7) // 8) * 8)
    num_steps = -(-C // CT)
    C_pad = num_steps * CT

    # Activations: no mention duplication / concat — just pad + flatten clusters.
    x_flat = jnp.pad(cluster_hidden_states.astype(bf16),
                     ((0, C_pad - C), (0, 0), (0, 0))).reshape(C_pad * L, Hd)
    maskf = jnp.pad(attention_mask.astype(jnp.float32),
                    ((0, C_pad - C), (0, 0))).reshape(num_steps, CT * L)

    out = pl.pallas_call(
        _mcc_kernel,
        out_shape=jax.ShapeDtypeStruct((num_steps, 1, CT), jnp.float32),
        grid_spec=pltpu.PrefetchScalarGridSpec(
            num_scalar_prefetch=0,
            grid=(num_steps,),
            in_specs=[
                pl.BlockSpec((CT * L, Hd), lambda c: (c, 0)),          # cluster tokens
                pl.BlockSpec((1, CT * L), lambda c: (c, 0)),           # token validity
                pl.BlockSpec((1, Hd), lambda c: (0, 0)),               # q (pre-scaled)
                pl.BlockSpec((1, Hd), lambda c: (0, 0)),               # mention value row
                pl.BlockSpec((1, Hd), lambda c: (0, 0)),               # mention residual
                pl.BlockSpec((Hd, 2 * Hd), lambda c: (0, 0)),          # Wkv (fused)
                pl.BlockSpec((Hd, Hd), lambda c: (0, 0)),              # Wo
                pl.BlockSpec((Hd, F), lambda c: (0, 0)),               # W1
                pl.BlockSpec((1, F), lambda c: (0, 0)),                # W2@Wc row
                pl.BlockSpec((1, Hd), lambda c: (0, 0)),               # Wcls row
                pl.BlockSpec(memory_space=pltpu.MemorySpace.SMEM),     # [s_cls, bcls]
            ],
            out_specs=pl.BlockSpec((1, 1, CT), lambda c: (c, 0, 0)),
        ),
        compiler_params=pltpu.CompilerParams(
            dimension_semantics=("parallel",)),
    )(x_flat, maskf, q_row.astype(bf16), m_v, mention_hidden_states,
      wkv, wo_b, w1_b, w2c_row, wc_row, scalars)

    logits = out.reshape(C_pad, 1)[:C]                                 # (C, 1)

    loss = None
    if labels is not None:
        # binary_cross_entropy_with_logits(logits, labels.unsqueeze(1)), mean reduction
        y = labels[:, None].astype(jnp.float32)
        z = logits
        loss = jnp.mean(jnp.maximum(z, 0.0) - z * y + jnp.log1p(jnp.exp(-jnp.abs(z))))
    return loss, logits


def _reference(mention_hs, cluster_hs, attention_mask, params, labels):
    """Pure-JAX f32 reference of the same synthetic model, for a silent check."""
    C, L, Hd = cluster_hs.shape
    wq, wk, wv, wo, w1, w2, wc, bc = params
    rep = jnp.broadcast_to(mention_hs[None, :, :], (C, 1, Hd))
    x = jnp.concatenate([rep, cluster_hs], axis=1)
    mask = jnp.concatenate([jnp.ones((C, 1), jnp.float32),
                            attention_mask.astype(jnp.float32)], axis=1)
    q = x @ wq
    k = x @ wk
    v = x @ wv
    scores = jnp.einsum("csh,cth->cst", q, k) / math.sqrt(Hd)
    scores = scores + (1.0 - mask[:, None, :]) * (-1e9)
    p = jax.nn.softmax(scores, axis=-1)
    ctx = jnp.einsum("cst,cth->csh", p, v)
    h = ctx @ wo + x
    h2 = jax.nn.gelu(h @ w1, approximate=True) @ w2 + h
    logits = h2[:, 0, :] @ wc + bc[0]
    y = labels[:, None].astype(jnp.float32)
    loss = jnp.mean(jnp.maximum(logits, 0.0) - logits * y
                    + jnp.log1p(jnp.exp(-jnp.abs(logits))))
    return loss, logits


if __name__ == "__main__":
    key = jax.random.PRNGKey(0)
    ks = jax.random.split(key, 12)

    C, L = 20, 7                 # clusters, cluster seq length (S = 1 + L = 8)

    mention_hs = jax.random.normal(ks[0], (1, H), jnp.float32) * 0.5
    cluster_hs = jax.random.normal(ks[1], (C, L, H), jnp.float32) * 0.5
    lengths = jax.random.randint(ks[2], (C,), 1, L + 1)
    attention_mask = (jnp.arange(L)[None, :] < lengths[:, None]).astype(jnp.float32)
    labels = (jax.random.uniform(ks[3], (C,)) > 0.5).astype(jnp.float32)

    scale = 0.05
    params = (
        jax.random.normal(ks[4], (H, H), jnp.float32) * scale,   # Wq
        jax.random.normal(ks[5], (H, H), jnp.float32) * scale,   # Wk
        jax.random.normal(ks[6], (H, H), jnp.float32) * scale,   # Wv
        jax.random.normal(ks[7], (H, H), jnp.float32) * scale,   # Wo
        jax.random.normal(ks[8], (H, F), jnp.float32) * scale,   # W1
        jax.random.normal(ks[9], (F, H), jnp.float32) * scale,   # W2
        jax.random.normal(ks[10], (H, 1), jnp.float32) * scale,  # Wcls
        jnp.array([0.1], jnp.float32),                           # bcls
    )

    loss, logits = mention_cluster_classifier(mention_hs, cluster_hs,
                                              attention_mask, params, labels)
    jax.block_until_ready((loss, logits))

    ref_loss, ref_logits = _reference(mention_hs, cluster_hs, attention_mask,
                                      params, labels)
    assert logits.shape == (C, 1)
    # Kernel uses bf16 MXU operands (f32 accumulation); reference is pure f32.
    assert jnp.allclose(logits, ref_logits, atol=1e-2, rtol=1e-2)
    assert jnp.allclose(loss, ref_loss, atol=1e-2, rtol=1e-2)

    # Exercise the multi-step grid / block-diagonal masking path as well.
    loss2, logits2 = mention_cluster_classifier(mention_hs, cluster_hs,
                                                attention_mask, params, labels,
                                                cluster_tile=8)
    jax.block_until_ready((loss2, logits2))
    assert jnp.allclose(logits2, ref_logits, atol=1e-2, rtol=1e-2)
    assert jnp.allclose(loss2, ref_loss, atol=1e-2, rtol=1e-2)

    print("KERNEL_OK")
</pallas_src>

<mosaic_0001>
module attributes {stable_mosaic.version = 11 : i64} {
  func.func @_mcc_kernel(%arg0: i32, %arg1: memref<168x128xbf16, #tpu.memory_space<vmem>>, %arg2: memref<1x168xf32, #tpu.memory_space<vmem>>, %arg3: memref<1x128xbf16, #tpu.memory_space<vmem>>, %arg4: memref<1x128xf32, #tpu.memory_space<vmem>>, %arg5: memref<1x128xf32, #tpu.memory_space<vmem>>, %arg6: memref<128x256xbf16, #tpu.memory_space<vmem>>, %arg7: memref<128x128xbf16, #tpu.memory_space<vmem>>, %arg8: memref<128x128xbf16, #tpu.memory_space<vmem>>, %arg9: memref<1x128xbf16, #tpu.memory_space<vmem>>, %arg10: memref<1x128xbf16, #tpu.memory_space<vmem>>, %arg11: memref<2xf32, #tpu.memory_space<smem>>, %arg12: memref<1x1x24xf32, #tpu.memory_space<vmem>>) attributes {dimension_semantics = [#tpu.dimension_semantics<parallel>], iteration_bounds = array<i64: 1>, scalar_prefetch = 0 : i64, scratch_operands = 0 : i64, tpu.core_type = #tpu.core_type<tc>, window_params = [{transform_indices = @transform_0, window_bounds = array<i64: 168, 128>}, {transform_indices = @transform_1, window_bounds = array<i64: 1, 168>}, {pipeline_mode = #tpu.pipeline_mode<synchronous>, transform_indices = @transform_2, window_bounds = array<i64: 1, 128>}, {pipeline_mode = #tpu.pipeline_mode<synchronous>, transform_indices = @transform_3, window_bounds = array<i64: 1, 128>}, {pipeline_mode = #tpu.pipeline_mode<synchronous>, transform_indices = @transform_4, window_bounds = array<i64: 1, 128>}, {pipeline_mode = #tpu.pipeline_mode<synchronous>, transform_indices = @transform_5, window_bounds = array<i64: 128, 256>}, {pipeline_mode = #tpu.pipeline_mode<synchronous>, transform_indices = @transform_6, window_bounds = array<i64: 128, 128>}, {pipeline_mode = #tpu.pipeline_mode<synchronous>, transform_indices = @transform_7, window_bounds = array<i64: 128, 128>}, {pipeline_mode = #tpu.pipeline_mode<synchronous>, transform_indices = @transform_8, window_bounds = array<i64: 1, 128>}, {pipeline_mode = #tpu.pipeline_mode<synchronous>, transform_indices = @transform_9, window_bounds = array<i64: 1, 128>}, {transform_indices = @transform_10, window_bounds = array<i64: 2>}, {transform_indices = @transform_11, window_bounds = array<i64: 1, 1, 24>}]} {
    %c0 = arith.constant 0 : index
    %c0_0 = arith.constant 0 : index
    %0 = vector.load %arg1[%c0, %c0_0] : memref<168x128xbf16, #tpu.memory_space<vmem>>, vector<168x128xbf16>
    %c0_1 = arith.constant 0 : index
    %c0_2 = arith.constant 0 : index
    %1 = vector.load %arg6[%c0_1, %c0_2] : memref<128x256xbf16, #tpu.memory_space<vmem>>, vector<128x256xbf16>
    %cst = arith.constant dense<0.000000e+00> : vector<168x256xf32>
    %2 = tpu.matmul %0, %1, %cst {dimension_numbers = #tpu.dot_dimension_numbers<[1], [0], [0], [1], [0, 0, 1, 1], [], []>} : vector<168x128xbf16>, vector<128x256xbf16>, vector<168x256xf32> -> vector<168x256xf32>
    %3 = vector.extract_strided_slice %2 {offsets = [0, 0], sizes = [168, 128], strides = [1, 1]} : vector<168x256xf32> to vector<168x128xf32>
    %4 = vector.extract_strided_slice %2 {offsets = [0, 128], sizes = [168, 128], strides = [1, 1]} : vector<168x256xf32> to vector<168x128xf32>
    %c0_3 = arith.constant 0 : index
    %c0_4 = arith.constant 0 : index
    %5 = vector.load %arg3[%c0_3, %c0_4] : memref<1x128xbf16, #tpu.memory_space<vmem>>, vector<1x128xbf16>
    %6 = arith.truncf %3 : vector<168x128xf32> to vector<168x128xbf16>
    %cst_5 = arith.constant dense<0.000000e+00> : vector<1x168xf32>
    %7 = tpu.matmul %5, %6, %cst_5 {dimension_numbers = #tpu.dot_dimension_numbers<[1], [1], [0], [0], [0, 0, 1, 0], [], []>} : vector<1x128xbf16>, vector<168x128xbf16>, vector<1x168xf32> -> vector<1x168xf32>
    %8 = tpu.iota {dimensions = array<i32: 0>} : vector<24x168xi32>
    %9 = tpu.iota {dimensions = array<i32: 1>} : vector<24x168xi32>
    %c7_i32 = arith.constant 7 : i32
    %10 = vector.broadcast %c7_i32 : i32 to vector<24x168xi32>
    %11 = arith.muli %8, %10 : vector<24x168xi32>
    %12 = arith.cmpi sge, %9, %11 : vector<24x168xi32>
    %c7_i32_6 = arith.constant 7 : i32
    %13 = vector.broadcast %c7_i32_6 : i32 to vector<24x168xi32>
    %14 = arith.addi %11, %13 : vector<24x168xi32>
    %15 = arith.cmpi slt, %9, %14 : vector<24x168xi32>
    %16 = arith.andi %12, %15 : vector<24x168xi1>
    %c0_7 = arith.constant 0 : index
    %c0_8 = arith.constant 0 : index
    %17 = vector.load %arg2[%c0_7, %c0_8] : memref<1x168xf32, #tpu.memory_space<vmem>>, vector<1x168xf32>
    %cst_9 = arith.constant 0.000000e+00 : f32
    %18 = vector.broadcast %cst_9 : f32 to vector<1x168xf32>
    %19 = arith.cmpf ogt, %17, %18 : vector<1x168xf32>
    %20 = vector.broadcast %19 : vector<1x168xi1> to vector<24x168xi1>
    %21 = arith.andi %16, %20 : vector<24x168xi1>
    %cst_10 = arith.constant -1.000000e+09 : f32
    %22 = vector.shape_cast %7 : vector<1x168xf32> to vector<1x168xf32>
    %23 = vector.broadcast %22 : vector<1x168xf32> to vector<24x168xf32>
    %24 = vector.broadcast %cst_10 : f32 to vector<24x168xf32>
    %25 = arith.select %21, %23, %24 : vector<24x168xi1>, vector<24x168xf32>
    %c0_11 = arith.constant 0 : index
    %26 = memref.load %arg11[%c0_11] : memref<2xf32, #tpu.memory_space<smem>>
    %cst_12 = arith.constant dense<0xFF800000> : vector<24xf32>
    %27 = vector.multi_reduction <maximumf>, %25, %cst_12 [1] : vector<24x168xf32> to vector<24xf32>
    %28 = vector.shape_cast %27 : vector<24xf32> to vector<24x1xf32>
    %29 = vector.broadcast %26 : f32 to vector<24x1xf32>
    %30 = arith.maximumf %28, %29 : vector<24x1xf32>
    %31 = vector.broadcast %30 : vector<24x1xf32> to vector<24x168xf32>
    %32 = arith.subf %25, %31 : vector<24x168xf32>
    %33 = math.exp %32 : vector<24x168xf32>
    %34 = vector.broadcast %26 : f32 to vector<24x1xf32>
    %35 = arith.subf %34, %30 : vector<24x1xf32>
    %36 = math.exp %35 : vector<24x1xf32>
    %cst_13 = arith.constant dense<0.000000e+00> : vector<24xf32>
    %37 = vector.multi_reduction <add>, %33, %cst_13 [1] : vector<24x168xf32> to vector<24xf32>
    %38 = vector.shape_cast %37 : vector<24xf32> to vector<24x1xf32>
    %39 = arith.addf %38, %36 : vector<24x1xf32>
    %40 = arith.truncf %33 : vector<24x168xf32> to vector<24x168xbf16>
    %41 = arith.truncf %4 : vector<168x128xf32> to vector<168x128xbf16>
    %cst_14 = arith.constant dense<0.000000e+00> : vector<24x128xf32>
    %42 = tpu.matmul %40, %41, %cst_14 {dimension_numbers = #tpu.dot_dimension_numbers<[1], [0], [0], [1], [0, 0, 1, 1], [], []>} : vector<24x168xbf16>, vector<168x128xbf16>, vector<24x128xf32> -> vector<24x128xf32>
    %c0_15 = arith.constant 0 : index
    %c0_16 = arith.constant 0 : index
    %43 = vector.load %arg4[%c0_15, %c0_16] : memref<1x128xf32, #tpu.memory_space<vmem>>, vector<1x128xf32>
    %44 = vector.broadcast %36 : vector<24x1xf32> to vector<24x128xf32>
    %45 = vector.broadcast %43 : vector<1x128xf32> to vector<24x128xf32>
    %46 = arith.mulf %44, %45 : vector<24x128xf32>
    %47 = arith.addf %42, %46 : vector<24x128xf32>
    %48 = tpu.reciprocal %39 {approx = true} : vector<24x1xf32> -> vector<24x1xf32>
    %49 = vector.broadcast %48 : vector<24x1xf32> to vector<24x128xf32>
    %50 = arith.mulf %47, %49 : vector<24x128xf32>
    %51 = arith.truncf %50 : vector<24x128xf32> to vector<24x128xbf16>
    %c0_17 = arith.constant 0 : index
    %c0_18 = arith.constant 0 : index
    %52 = vector.load %arg7[%c0_17, %c0_18] : memref<128x128xbf16, #tpu.memory_space<vmem>>, vector<128x128xbf16>
    %cst_19 = arith.constant dense<0.000000e+00> : vector<24x128xf32>
    %53 = tpu.matmul %51, %52, %cst_19 {dimension_numbers = #tpu.dot_dimension_numbers<[1], [0], [0], [1], [0, 0, 1, 1], [], []>} : vector<24x128xbf16>, vector<128x128xbf16>, vector<24x128xf32> -> vector<24x128xf32>
    %c0_20 = arith.constant 0 : index
    %c0_21 = arith.constant 0 : index
    %54 = vector.load %arg5[%c0_20, %c0_21] : memref<1x128xf32, #tpu.memory_space<vmem>>, vector<1x128xf32>
    %55 = vector.broadcast %54 : vector<1x128xf32> to vector<24x128xf32>
    %56 = arith.addf %53, %55 : vector<24x128xf32>
    %57 = arith.truncf %56 : vector<24x128xf32> to vector<24x128xbf16>
    %c0_22 = arith.constant 0 : index
    %c0_23 = arith.constant 0 : index
    %58 = vector.load %arg8[%c0_22, %c0_23] : memref<128x128xbf16, #tpu.memory_space<vmem>>, vector<128x128xbf16>
    %cst_24 = arith.constant dense<0.000000e+00> : vector<24x128xf32>
    %59 = tpu.matmul %57, %58, %cst_24 {dimension_numbers = #tpu.dot_dimension_numbers<[1], [0], [0], [1], [0, 0, 1, 1], [], []>} : vector<24x128xbf16>, vector<128x128xbf16>, vector<24x128xf32> -> vector<24x128xf32>
    %60 = arith.mulf %59, %59 : vector<24x128xf32>
    %61 = arith.mulf %59, %60 : vector<24x128xf32>
    %cst_25 = arith.constant 4.471500e-02 : f32
    %62 = vector.broadcast %cst_25 : f32 to vector<24x128xf32>
    %63 = arith.mulf %62, %61 : vector<24x128xf32>
    %64 = arith.addf %59, %63 : vector<24x128xf32>
    %cst_26 = arith.constant 0.797884583 : f32
    %65 = vector.broadcast %cst_26 : f32 to vector<24x128xf32>
    %66 = arith.mulf %65, %64 : vector<24x128xf32>
    %67 = math.tanh %66 : vector<24x128xf32>
    %cst_27 = arith.constant 1.000000e+00 : f32
    %68 = vector.broadcast %cst_27 : f32 to vector<24x128xf32>
    %69 = arith.addf %68, %67 : vector<24x128xf32>
    %cst_28 = arith.constant 5.000000e-01 : f32
    %70 = vector.broadcast %cst_28 : f32 to vector<24x128xf32>
    %71 = arith.mulf %70, %69 : vector<24x128xf32>
    %72 = arith.mulf %59, %71 : vector<24x128xf32>
    %c0_29 = arith.constant 0 : index
    %c0_30 = arith.constant 0 : index
    %73 = vector.load %arg9[%c0_29, %c0_30] : memref<1x128xbf16, #tpu.memory_space<vmem>>, vector<1x128xbf16>
    %74 = arith.truncf %72 : vector<24x128xf32> to vector<24x128xbf16>
    %cst_31 = arith.constant dense<0.000000e+00> : vector<1x24xf32>
    %75 = tpu.matmul %73, %74, %cst_31 {dimension_numbers = #tpu.dot_dimension_numbers<[1], [1], [0], [0], [0, 0, 1, 0], [], []>} : vector<1x128xbf16>, vector<24x128xbf16>, vector<1x24xf32> -> vector<1x24xf32>
    %c0_32 = arith.constant 0 : index
    %c0_33 = arith.constant 0 : index
    %76 = vector.load %arg10[%c0_32, %c0_33] : memref<1x128xbf16, #tpu.memory_space<vmem>>, vector<1x128xbf16>
    %77 = arith.truncf %56 : vector<24x128xf32> to vector<24x128xbf16>
    %cst_34 = arith.constant dense<0.000000e+00> : vector<1x24xf32>
    %78 = tpu.matmul %76, %77, %cst_34 {dimension_numbers = #tpu.dot_dimension_numbers<[1], [1], [0], [0], [0, 0, 1, 0], [], []>} : vector<1x128xbf16>, vector<24x128xbf16>, vector<1x24xf32> -> vector<1x24xf32>
    %79 = arith.addf %75, %78 : vector<1x24xf32>
    %c1 = arith.constant 1 : index
    %80 = memref.load %arg11[%c1] : memref<2xf32, #tpu.memory_space<smem>>
    %81 = vector.broadcast %80 : f32 to vector<1x24xf32>
    %82 = arith.addf %79, %81 : vector<1x24xf32>
    %c0_35 = arith.constant 0 : index
    %c0_36 = arith.constant 0 : index
    %c0_37 = arith.constant 0 : index
    %83 = vector.load %arg12[%c0_35, %c0_36, %c0_37] : memref<1x1x24xf32, #tpu.memory_space<vmem>>, vector<1x1x24xf32>
    %84 = vector.shape_cast %83 : vector<1x1x24xf32> to vector<1x24xf32>
    %85 = vector.shape_cast %82 : vector<1x24xf32> to vector<1x1x24xf32>
    tpu.vector_store %arg12[%c0_35, %c0_36, %c0_37], %85 {strides = array<i32>} : memref<1x1x24xf32, #tpu.memory_space<vmem>>, vector<1x1x24xf32>,
    return
  }
  func.func @transform_0(%arg0: i32) -> (i32, i32) {
    %c0_i32 = arith.constant 0 : i32
    %c0_i32_0 = arith.constant 0 : i32
    return %arg0, %c0_i32 : i32, i32
  }
  func.func @transform_1(%arg0: i32) -> (i32, i32) {
    %c0_i32 = arith.constant 0 : i32
    %c0_i32_0 = arith.constant 0 : i32
    return %arg0, %c0_i32 : i32, i32
  }
  func.func @transform_2(%arg0: i32) -> (i32, i32) {
    %c0_i32 = arith.constant 0 : i32
    %c0_i32_0 = arith.constant 0 : i32
    %c0_i32_1 = arith.constant 0 : i32
    return %c0_i32, %c0_i32_0 : i32, i32
  }
  func.func @transform_3(%arg0: i32) -> (i32, i32) {
    %c0_i32 = arith.constant 0 : i32
    %c0_i32_0 = arith.constant 0 : i32
    %c0_i32_1 = arith.constant 0 : i32
    return %c0_i32, %c0_i32_0 : i32, i32
  }
  func.func @transform_4(%arg0: i32) -> (i32, i32) {
    %c0_i32 = arith.constant 0 : i32
    %c0_i32_0 = arith.constant 0 : i32
    %c0_i32_1 = arith.constant 0 : i32
    return %c0_i32, %c0_i32_0 : i32, i32
  }
  func.func @transform_5(%arg0: i32) -> (i32, i32) {
    %c0_i32 = arith.constant 0 : i32
    %c0_i32_0 = arith.constant 0 : i32
    %c0_i32_1 = arith.constant 0 : i32
    return %c0_i32, %c0_i32_0 : i32, i32
  }
  func.func @transform_6(%arg0: i32) -> (i32, i32) {
    %c0_i32 = arith.constant 0 : i32
    %c0_i32_0 = arith.constant 0 : i32
    %c0_i32_1 = arith.constant 0 : i32
    return %c0_i32, %c0_i32_0 : i32, i32
  }
  func.func @transform_7(%arg0: i32) -> (i32, i32) {
    %c0_i32 = arith.constant 0 : i32
    %c0_i32_0 = arith.constant 0 : i32
    %c0_i32_1 = arith.constant 0 : i32
    return %c0_i32, %c0_i32_0 : i32, i32
  }
  func.func @transform_8(%arg0: i32) -> (i32, i32) {
    %c0_i32 = arith.constant 0 : i32
    %c0_i32_0 = arith.constant 0 : i32
    %c0_i32_1 = arith.constant 0 : i32
    return %c0_i32, %c0_i32_0 : i32, i32
  }
  func.func @transform_9(%arg0: i32) -> (i32, i32) {
    %c0_i32 = arith.constant 0 : i32
    %c0_i32_0 = arith.constant 0 : i32
    %c0_i32_1 = arith.constant 0 : i32
    return %c0_i32, %c0_i32_0 : i32, i32
  }
  func.func @transform_10(%arg0: i32) -> i32 {
    %c0_i32 = arith.constant 0 : i32
    %c0_i32_0 = arith.constant 0 : i32
    return %c0_i32 : i32
  }
  func.func @transform_11(%arg0: i32) -> (i32, i32, i32) {
    %c0_i32 = arith.constant 0 : i32
    %c0_i32_0 = arith.constant 0 : i32
    %c0_i32_1 = arith.constant 0 : i32
    return %arg0, %c0_i32, %c0_i32_0 : i32, i32, i32
  }
}

</mosaic_0001>

<llo_original>
// kernel: tpu_custom_call.1
$region0: #{tpu_custom_call.1}
  #allocation0 [shape = 'u32[]', space=smem, size = 0x4, offset = 0x4, fixed_abs, tag = 'smem constant byte address 0x4 - core index']
  #allocation1 [shape = 'u32[72,128]{1,0:T(1,128)}', space=vmem, size = 0x9000, scoped, tag = 'internal scratch']
  %s0 = inlined_call_operand.hbm [shape: bf16[168,128], index: 0, kind: input, shape index: {}]
  %s1 = inlined_call_operand.hbm [shape: f32[1,168], index: 1, kind: input, shape index: {}]
  %s2 = inlined_call_operand.vmem [shape: bf16[1,128], index: 2, kind: input, shape index: {}]
  %s3 = inlined_call_operand.vmem [shape: f32[1,128], index: 3, kind: input, shape index: {}]
  %s4 = inlined_call_operand.vmem [shape: f32[1,128], index: 4, kind: input, shape index: {}]
  %s5 = inlined_call_operand.hbm [shape: bf16[128,256], index: 5, kind: input, shape index: {}]
  %s6 = inlined_call_operand.hbm [shape: bf16[128,128], index: 6, kind: input, shape index: {}]
  %s7 = inlined_call_operand.hbm [shape: bf16[128,128], index: 7, kind: input, shape index: {}]
  %s8 = inlined_call_operand.vmem [shape: bf16[1,128], index: 8, kind: input, shape index: {}]
  %s9 = inlined_call_operand.vmem [shape: bf16[1,128], index: 9, kind: input, shape index: {}]
  %s10 = inlined_call_operand.vmem [shape: f32[2], index: 10, kind: input, shape index: {}]
  %s11 = inlined_call_operand.hbm [shape: f32[1,1,24], index: 11, kind: output, shape index: {}]
  %s12 = sld [smem:[#allocation0]]
  $region78: #{tpu_custom_call.1} parent=0
    _
  %s14 = ssub.s32 1, %s12
  %s15 = scalar_select 0, %s14, %s12
  $region1: #{tpu_custom_call.1} parent=0
    #allocation2 [shape = 'u8[43008]{0}', space=vmem, size = 0xa800, scoped, tag = 'input window, operand 0, single buffered']
    #allocation3 [shape = 's32[1]{0}', space=sflag, size = 0x4, scoped, tag = 'scoped memory for tpu_custom_call.1']
    #allocation4 [shape = 's32[1]{0}', space=sflag, size = 0x4, scoped, tag = 'scoped memory for tpu_custom_call.1']
    #allocation5 [shape = 's32[1]{0}', space=sflag, size = 0x4, scoped, tag = 'scoped memory for tpu_custom_call.1']
    #allocation6 [shape = 'u8[1024]{0}', space=vmem, size = 0x400, scoped, tag = 'input window, operand 1, single buffered']
    #allocation7 [shape = 's32[1]{0}', space=sflag, size = 0x4, scoped, tag = 'scoped memory for tpu_custom_call.1']
    #allocation8 [shape = 'u8[65536]{0}', space=vmem, size = 0x10000, scoped, tag = 'input window, operand 5, single buffered']
    #allocation9 [shape = 'u8[32768]{0}', space=vmem, size = 0x8000, scoped, tag = 'input window, operand 6, single buffered']
    #allocation10 [shape = 's32[1]{0}', space=sflag, size = 0x4, scoped, tag = 'scoped memory for tpu_custom_call.1']
    #allocation11 [shape = 'u8[32768]{0}', space=vmem, size = 0x8000, scoped, tag = 'input window, operand 7, single buffered']
    #allocation12 [shape = 'u8[512]{0}', space=smem, size = 0x200, scoped, tag = 'input window, operand 10, single buffered']
    #allocation13 [shape = 'u8[512]{0}', space=vmem, size = 0x400, scoped, tag = 'output window, operand 0, single buffered']
    %16 = vsyncpa [#allocation3], 0
    %17 = vsyncpa [#allocation7], 0
    %18 = vsyncpa [#allocation10], 0
    %19 = vsyncpa [#allocation5], 0
    %20 = vsyncpa [#allocation4], 0
    // Predicated region
    $region2: #{tpu_custom_call.1} parent=1 // pred_check
      _
    $region3: #{tpu_custom_call.1} parent=1 // pred_check_branch
      %22 = sbr.rel (0) target = $region5
    $region4: #{tpu_custom_call.1} parent=1 // pred_region
      %24 = vsyncadd [#allocation3], 0
      %s25 = sshll.u32 %s0, 4
      %s26 = int_to_ptr.hbm [resolvable:$true] %s25
      %s27 = sshll.u32 [#allocation2], 4
      %s28 = int_to_ptr.vmem [resolvable:$true] %s27
      %33 = dma.hbm_to_vmem [thread:$0]  %s26, 1344, %s28, [#allocation3], 64, 64, 4
    $region5: #{tpu_custom_call.1} parent=1 // pred_fallthru
      _
    // Predicated region
    $region6: #{tpu_custom_call.1} parent=1 // pred_check
      _
    $region7: #{tpu_custom_call.1} parent=1 // pred_check_branch
      %35 = sbr.rel (0) target = $region9
    $region8: #{tpu_custom_call.1} parent=1 // pred_region
      %37 = vsyncadd [#allocation7], 0
      %s39 = sshll.u32 %s1, 4
      %s40 = int_to_ptr.hbm [resolvable:$true] %s39
      %s41 = sshll.u32 [#allocation6], 4
      %s42 = int_to_ptr.vmem [resolvable:$true] %s41
      %44 = dma.hbm_to_vmem [thread:$0]  %s40, 32, %s42, [#allocation7]
    $region9: #{tpu_custom_call.1} parent=1 // pred_fallthru
      _
    // Predicated region
    $region10: #{tpu_custom_call.1} parent=1 // pred_check
      _
    $region11: #{tpu_custom_call.1} parent=1 // pred_check_branch
      %46 = sbr.rel (0) target = $region13
    $region12: #{tpu_custom_call.1} parent=1 // pred_region
      _
    $region13: #{tpu_custom_call.1} parent=1 // pred_fallthru
      _
    // Predicated region
    $region14: #{tpu_custom_call.1} parent=1 // pred_check
      _
    $region15: #{tpu_custom_call.1} parent=1 // pred_check_branch
      %48 = sbr.rel (0) target = $region17
    $region16: #{tpu_custom_call.1} parent=1 // pred_region
      _
    $region17: #{tpu_custom_call.1} parent=1 // pred_fallthru
      _
    // Predicated region
    $region18: #{tpu_custom_call.1} parent=1 // pred_check
      _
    $region19: #{tpu_custom_call.1} parent=1 // pred_check_branch
      %50 = sbr.rel (0) target = $region21
    $region20: #{tpu_custom_call.1} parent=1 // pred_region
      _
    $region21: #{tpu_custom_call.1} parent=1 // pred_fallthru
      _
    // Predicated region
    $region22: #{tpu_custom_call.1} parent=1 // pred_check
      _
    $region23: #{tpu_custom_call.1} parent=1 // pred_check_branch
      %52 = sbr.rel (0) target = $region25
    $region24: #{tpu_custom_call.1} parent=1 // pred_region
      %54 = vsyncadd [#allocation7], 0
      %s55 = sshll.u32 %s5, 4
      %s56 = int_to_ptr.hbm [resolvable:$true] %s55
      %s57 = sshll.u32 [#allocation8], 4
      %s58 = int_to_ptr.vmem [resolvable:$true] %s57
      %63 = dma.hbm_to_vmem [thread:$0]  %s56, 2048, %s58, [#allocation7], 128, 128, 8
    $region25: #{tpu_custom_call.1} parent=1 // pred_fallthru
      _
    // Predicated region
    $region26: #{tpu_custom_call.1} parent=1 // pred_check
      _
    $region27: #{tpu_custom_call.1} parent=1 // pred_check_branch
      %65 = sbr.rel (0) target = $region29
    $region28: #{tpu_custom_call.1} parent=1 // pred_region
      %67 = vsyncadd [#allocation10], 0
      %s68 = sshll.u32 %s6, 4
      %s69 = int_to_ptr.hbm [resolvable:$true] %s68
      %s70 = sshll.u32 [#allocation9], 4
      %s71 = int_to_ptr.vmem [resolvable:$true] %s70
      %76 = dma.hbm_to_vmem [thread:$0]  %s69, 1024, %s71, [#allocation10], 64, 64, 4
    $region29: #{tpu_custom_call.1} parent=1 // pred_fallthru
      _
    // Predicated region
    $region30: #{tpu_custom_call.1} parent=1 // pred_check
      _
    $region31: #{tpu_custom_call.1} parent=1 // pred_check_branch
      %78 = sbr.rel (0) target = $region33
    $region32: #{tpu_custom_call.1} parent=1 // pred_region
      %80 = vsyncadd [#allocation10], 0
      %s81 = sshll.u32 %s7, 4
      %s82 = int_to_ptr.hbm [resolvable:$true] %s81
      %s83 = sshll.u32 [#allocation11], 4
      %s84 = int_to_ptr.vmem [resolvable:$true] %s83
      %89 = dma.hbm_to_vmem [thread:$0]  %s82, 1024, %s84, [#allocation10], 64, 64, 4
    $region33: #{tpu_custom_call.1} parent=1 // pred_fallthru
      _
    // Predicated region
    $region34: #{tpu_custom_call.1} parent=1 // pred_check
      _
    $region35: #{tpu_custom_call.1} parent=1 // pred_check_branch
      %91 = sbr.rel (0) target = $region37
    $region36: #{tpu_custom_call.1} parent=1 // pred_region
      _
    $region37: #{tpu_custom_call.1} parent=1 // pred_fallthru
      _
    // Predicated region
    $region38: #{tpu_custom_call.1} parent=1 // pred_check
      _
    $region39: #{tpu_custom_call.1} parent=1 // pred_check_branch
      %93 = sbr.rel (0) target = $region41
    $region40: #{tpu_custom_call.1} parent=1 // pred_region
      _
    $region41: #{tpu_custom_call.1} parent=1 // pred_fallthru
      _
    // Predicated region
    $region42: #{tpu_custom_call.1} parent=1 // pred_check
      _
    $region43: #{tpu_custom_call.1} parent=1 // pred_check_branch
      %95 = sbr.rel (0) target = $region45
    $region44: #{tpu_custom_call.1} parent=1 // pred_region
      %97 = vsyncadd [#allocation5], 0
      %s99 = sshll.u32 %s10, 4
      %s100 = int_to_ptr.vmem [resolvable:$true] %s99
      %102 = dma.vmem_to_smem %s100, 16, [#allocation12], [#allocation5]
    $region45: #{tpu_custom_call.1} parent=1 // pred_fallthru
      _
    // Predicated region
    $region46: #{tpu_custom_call.1} parent=1 // pred_check
      _
    $region47: #{tpu_custom_call.1} parent=1 // pred_check_branch
      %104 = sbr.rel (0) target = $region49
    $region48: #{tpu_custom_call.1} parent=1 // pred_region
      %106 = dma.done [#allocation3], 1344
    $region49: #{tpu_custom_call.1} parent=1 // pred_fallthru
      _
    // Predicated region
    $region50: #{tpu_custom_call.1} parent=1 // pred_check
      _
    $region51: #{tpu_custom_call.1} parent=1 // pred_check_branch
      %108 = sbr.rel (0) target = $region53
    $region52: #{tpu_custom_call.1} parent=1 // pred_region
      %110 = dma.done [#allocation7], 32
    $region53: #{tpu_custom_call.1} parent=1 // pred_fallthru
      _
    // Predicated region
    $region54: #{tpu_custom_call.1} parent=1 // pred_check
      _
    $region55: #{tpu_custom_call.1} parent=1 // pred_check_branch
      %112 = sbr.rel (0) target = $region57
    $region56: #{tpu_custom_call.1} parent=1 // pred_region
      %114 = dma.done [#allocation7], 2048
    $region57: #{tpu_custom_call.1} parent=1 // pred_fallthru
      _
    // Predicated region
    $region58: #{tpu_custom_call.1} parent=1 // pred_check
      _
    $region59: #{tpu_custom_call.1} parent=1 // pred_check_branch
      %116 = sbr.rel (0) target = $region61
    $region60: #{tpu_custom_call.1} parent=1 // pred_region
      %118 = dma.done [#allocation10], 1024
    $region61: #{tpu_custom_call.1} parent=1 // pred_fallthru
      _
    // Predicated region
    $region62: #{tpu_custom_call.1} parent=1 // pred_check
      _
    $region63: #{tpu_custom_call.1} parent=1 // pred_check_branch
      %120 = sbr.rel (0) target = $region65
    $region64: #{tpu_custom_call.1} parent=1 // pred_region
      %122 = dma.done [#allocation10], 1024
    $region65: #{tpu_custom_call.1} parent=1 // pred_fallthru
      _
    // Predicated region
    $region66: #{tpu_custom_call.1} parent=1 // pred_check
      _
    $region67: #{tpu_custom_call.1} parent=1 // pred_check_branch
      %124 = sbr.rel (0) target = $region69
    $region68: #{tpu_custom_call.1} parent=1 // pred_region
      %126 = dma.done [#allocation5], 16
    $region69: #{tpu_custom_call.1} parent=1 // pred_fallthru
      _
    %127 = sfence
    %v129 = vld [vmem:[#allocation2] sm:$0xf]
    %v130 = vld [vmem:[#allocation2 + $0x4] sm:$0xf]
    %v131 = vld [vmem:[#allocation2 + $0x8] sm:$0xf]
    %v132 = vld [vmem:[#allocation2 + $0xc] sm:$0xf]
    %v133 = vld [vmem:[#allocation2 + $0x10] sm:$0xf]
    %v134 = vld [vmem:[#allocation2 + $0x14] sm:$0xf]
    %v135 = vld [vmem:[#allocation2 + $0x18] sm:$0xf]
    %v136 = vld [vmem:[#allocation2 + $0x1c] sm:$0xf]
    %v137 = vld [vmem:[#allocation2 + $0x20] sm:$0xf]
    %v138 = vld [vmem:[#allocation2 + $0x24] sm:$0xf]
    %v139 = vld [vmem:[#allocation2 + $0x28] sm:$0xf]
    %v140 = vld [vmem:[#allocation2 + $0x2c] sm:$0xf]
    %v141 = vld [vmem:[#allocation2 + $0x30] sm:$0xf]
    %v142 = vld [vmem:[#allocation2 + $0x34] sm:$0xf]
    %v143 = vld [vmem:[#allocation2 + $0x38] sm:$0xf]
    %v144 = vld [vmem:[#allocation2 + $0x3c] sm:$0xf]
    %v145 = vld [vmem:[#allocation2 + $0x40] sm:$0xf]
    %v146 = vld [vmem:[#allocation2 + $0x44] sm:$0xf]
    %v147 = vld [vmem:[#allocation2 + $0x48] sm:$0xf]
    %v148 = vld [vmem:[#allocation2 + $0x4c] sm:$0xf]
    %v149 = vld [vmem:[#allocation2 + $0x50] sm:$0xf]
    %v150 = vld [vmem:[#allocation8] sm:$0xff]
    %v151 = vld [vmem:[#allocation8 + $0x8] sm:$0xff]
    %v152 = vld [vmem:[#allocation8 + $0x10] sm:$0xff]
    %v153 = vld [vmem:[#allocation8 + $0x18] sm:$0xff]
    %v154 = vld [vmem:[#allocation8 + $0x20] sm:$0xff]
    %v155 = vld [vmem:[#allocation8 + $0x28] sm:$0xff]
    %v156 = vld [vmem:[#allocation8 + $0x30] sm:$0xff]
    %v157 = vld [vmem:[#allocation8 + $0x38] sm:$0xff]
    %v158 = vld [vmem:[#allocation8 + $0x40] sm:$0xff]
    %v159 = vld [vmem:[#allocation8 + $0x48] sm:$0xff]
    %v160 = vld [vmem:[#allocation8 + $0x50] sm:$0xff]
    %v161 = vld [vmem:[#allocation8 + $0x58] sm:$0xff]
    %v162 = vld [vmem:[#allocation8 + $0x60] sm:$0xff]
    %v163 = vld [vmem:[#allocation8 + $0x68] sm:$0xff]
    %v164 = vld [vmem:[#allocation8 + $0x70] sm:$0xff]
    %v165 = vld [vmem:[#allocation8 + $0x78] sm:$0xff]
    %v187 = vunpack.c.l.b16 %v129
    %v188 = vunpack.c.l.b16 %v130
    %v189 = vunpack.c.l.b16 %v131
    %v190 = vunpack.c.l.b16 %v132
    %v191 = vunpack.c.l.b16 %v133
    %v192 = vunpack.c.l.b16 %v134
    %v193 = vunpack.c.l.b16 %v135
    %v194 = vunpack.c.l.b16 %v136
    %v195 = vunpack.c.l.b16 %v137
    %v196 = vunpack.c.l.b16 %v138
    %v197 = vunpack.c.l.b16 %v139
    %v198 = vunpack.c.l.b16 %v140
    %v199 = vunpack.c.l.b16 %v141
    %v200 = vunpack.c.l.b16 %v142
    %v201 = vunpack.c.l.b16 %v143
    %v202 = vunpack.c.l.b16 %v144
    %v203 = vunpack.c.l.b16 %v145
    %v204 = vunpack.c.l.b16 %v146
    %v205 = vunpack.c.l.b16 %v147
    %v206 = vunpack.c.l.b16 %v148
    %v207 = vunpack.c.l.b16 %v149
    %v208 = vpack.c.b16 %v188, %v187
    %v209 = vpack.c.b16 %v190, %v189
    %v210 = vpack.c.b16 %v192, %v191
    %v211 = vpack.c.b16 %v194, %v193
    %v212 = vpack.c.b16 %v196, %v195
    %v213 = vpack.c.b16 %v198, %v197
    %v214 = vpack.c.b16 %v200, %v199
    %v215 = vpack.c.b16 %v202, %v201
    %v216 = vpack.c.b16 %v204, %v203
    %v217 = vpack.c.b16 %v206, %v205
    %v218 = vpack.c.b16 %v207, %v207
    %v246 = vunpack.c.l.b16 %v150
    %v247 = vunpack.c.h.b16 %v150
    %v248 = vunpack.c.l.b16 %v151
    %v249 = vunpack.c.h.b16 %v151
    %v250 = vunpack.c.l.b16 %v152
    %v251 = vunpack.c.h.b16 %v152
    %v252 = vunpack.c.l.b16 %v153
    %v253 = vunpack.c.h.b16 %v153
    %v254 = vunpack.c.l.b16 %v154
    %v255 = vunpack.c.h.b16 %v154
    %v256 = vunpack.c.l.b16 %v155
    %v257 = vunpack.c.h.b16 %v155
    %v258 = vunpack.c.l.b16 %v156
    %v259 = vunpack.c.h.b16 %v156
    %v260 = vunpack.c.l.b16 %v157
    %v261 = vunpack.c.h.b16 %v157
    %v262 = vunpack.c.l.b16 %v158
    %v263 = vunpack.c.h.b16 %v158
    %v264 = vunpack.c.l.b16 %v159
    %v265 = vunpack.c.h.b16 %v159
    %v266 = vunpack.c.l.b16 %v160
    %v267 = vunpack.c.h.b16 %v160
    %v268 = vunpack.c.l.b16 %v161
    %v269 = vunpack.c.h.b16 %v161
    %v270 = vunpack.c.l.b16 %v162
    %v271 = vunpack.c.h.b16 %v162
    %v272 = vunpack.c.l.b16 %v163
    %v273 = vunpack.c.h.b16 %v163
    %v274 = vunpack.c.l.b16 %v164
    %v275 = vunpack.c.h.b16 %v164
    %v276 = vunpack.c.l.b16 %v165
    %v277 = vunpack.c.h.b16 %v165
    %v278 = vpack.c.b16 %v248, %v246
    %v279 = vpack.c.b16 %v249, %v247
    %v280 = vpack.c.b16 %v252, %v250
    %v281 = vpack.c.b16 %v253, %v251
    %v282 = vpack.c.b16 %v256, %v254
    %v283 = vpack.c.b16 %v257, %v255
    %v284 = vpack.c.b16 %v260, %v258
    %v285 = vpack.c.b16 %v261, %v259
    %v286 = vpack.c.b16 %v264, %v262
    %v287 = vpack.c.b16 %v265, %v263
    %v288 = vpack.c.b16 %v268, %v266
    %v289 = vpack.c.b16 %v269, %v267
    %v290 = vpack.c.b16 %v272, %v270
    %v291 = vpack.c.b16 %v273, %v271
    %v292 = vpack.c.b16 %v276, %v274
    %v293 = vpack.c.b16 %v277, %v275
    %310 = vmatpush.bf16.msra.mxu0 %v292
    %311 = vmatpush.bf16.msra.mxu0 %v290
    %312 = vmatpush.bf16.msra.mxu0 %v288
    %313 = vmatpush.bf16.msra.mxu0 %v286
    %314 = vmatpush.bf16.msra.mxu0 %v284
    %315 = vmatpush.bf16.msra.mxu0 %v282
    %316 = vmatpush.bf16.msra.mxu0 %v280
    %317 = vmatpush.bf16.msra.mxu0 %v278
    %318 = vmatmul.bf16.gmra.mxu0 %v208
    %v319 = vpop.f32.mrf.mxu0
    %v320 = vadd.f32 0.0, %v319
    %v321 = vpop.f32.mrf.mxu0
    %v322 = vadd.f32 0.0, %v321
    %323 = vmatmul.bf16.gmra.mxu0 %v209
    %v324 = vpop.f32.mrf.mxu0
    %v325 = vadd.f32 0.0, %v324
    %v326 = vpop.f32.mrf.mxu0
    %v327 = vadd.f32 0.0, %v326
    %328 = vmatmul.bf16.gmra.mxu0 %v210
    %v329 = vpop.f32.mrf.mxu0
    %v330 = vadd.f32 0.0, %v329
    %v331 = vpop.f32.mrf.mxu0
    %v332 = vadd.f32 0.0, %v331
    %333 = vmatmul.bf16.gmra.mxu0 %v211
    %v334 = vpop.f32.mrf.mxu0
    %v335 = vadd.f32 0.0, %v334
    %v336 = vpop.f32.mrf.mxu0
    %v337 = vadd.f32 0.0, %v336
    %338 = vmatmul.bf16.gmra.mxu0 %v212
    %v339 = vpop.f32.mrf.mxu0
    %v340 = vadd.f32 0.0, %v339
    %v341 = vpop.f32.mrf.mxu0
    %v342 = vadd.f32 0.0, %v341
    %343 = vmatmul.bf16.gmra.mxu0 %v213
    %v344 = vpop.f32.mrf.mxu0
    %v345 = vadd.f32 0.0, %v344
    %v346 = vpop.f32.mrf.mxu0
    %v347 = vadd.f32 0.0, %v346
    %348 = vmatmul.bf16.gmra.mxu0 %v214
    %v349 = vpop.f32.mrf.mxu0
    %v350 = vadd.f32 0.0, %v349
    %v351 = vpop.f32.mrf.mxu0
    %v352 = vadd.f32 0.0, %v351
    %353 = vmatmul.bf16.gmra.mxu0 %v215
    %v354 = vpop.f32.mrf.mxu0
    %v355 = vadd.f32 0.0, %v354
    %v356 = vpop.f32.mrf.mxu0
    %v357 = vadd.f32 0.0, %v356
    %358 = vmatmul.bf16.gmra.mxu0 %v216
    %v359 = vpop.f32.mrf.mxu0
    %v360 = vadd.f32 0.0, %v359
    %v361 = vpop.f32.mrf.mxu0
    %v362 = vadd.f32 0.0, %v361
    %363 = vmatmul.bf16.gmra.mxu0 %v217
    %v364 = vpop.f32.mrf.mxu0
    %v365 = vadd.f32 0.0, %v364
    %v366 = vpop.f32.mrf.mxu0
    %v367 = vadd.f32 0.0, %v366
    %368 = vmatmul.bf16.gmra.mxu0 %v218
    %v369 = vpop.f32.mrf.mxu0
    %v370 = vadd.f32 0.0, %v369
    %v371 = vpop.f32.mrf.mxu0
    %372 = vdwg.mxu0
    %373 = vmatpush.bf16.msra.mxu0 %v293
    %374 = vmatpush.bf16.msra.mxu0 %v291
    %375 = vmatpush.bf16.msra.mxu0 %v289
    %376 = vmatpush.bf16.msra.mxu0 %v287
    %377 = vmatpush.bf16.msra.mxu0 %v285
    %378 = vmatpush.bf16.msra.mxu0 %v283
    %379 = vmatpush.bf16.msra.mxu0 %v281
    %380 = vmatpush.bf16.msra.mxu0 %v279
    %381 = vmatmul.bf16.gmra.mxu0 %v208
    %v382 = vpop.f32.mrf.mxu0
    %v383 = vadd.f32 0.0, %v382
    %v384 = vpop.f32.mrf.mxu0
    %v385 = vadd.f32 0.0, %v384
    %386 = vmatmul.bf16.gmra.mxu0 %v209
    %v387 = vpop.f32.mrf.mxu0
    %v388 = vadd.f32 0.0, %v387
    %v389 = vpop.f32.mrf.mxu0
    %v390 = vadd.f32 0.0, %v389
    %391 = vmatmul.bf16.gmra.mxu0 %v210
    %v392 = vpop.f32.mrf.mxu0
    %v393 = vadd.f32 0.0, %v392
    %v394 = vpop.f32.mrf.mxu0
    %v395 = vadd.f32 0.0, %v394
    %396 = vmatmul.bf16.gmra.mxu0 %v211
    %v397 = vpop.f32.mrf.mxu0
    %v398 = vadd.f32 0.0, %v397
    %v399 = vpop.f32.mrf.mxu0
    %v400 = vadd.f32 0.0, %v399
    %401 = vmatmul.bf16.gmra.mxu0 %v212
    %v402 = vpop.f32.mrf.mxu0
    %v403 = vadd.f32 0.0, %v402
    %v404 = vpop.f32.mrf.mxu0
    %v405 = vadd.f32 0.0, %v404
    %406 = vmatmul.bf16.gmra.mxu0 %v213
    %v407 = vpop.f32.mrf.mxu0
    %v408 = vadd.f32 0.0, %v407
    %v409 = vpop.f32.mrf.mxu0
    %v410 = vadd.f32 0.0, %v409
    %411 = vmatmul.bf16.gmra.mxu0 %v214
    %v412 = vpop.f32.mrf.mxu0
    %v413 = vadd.f32 0.0, %v412
    %v414 = vpop.f32.mrf.mxu0
    %v415 = vadd.f32 0.0, %v414
    %416 = vmatmul.bf16.gmra.mxu0 %v215
    %v417 = vpop.f32.mrf.mxu0
    %v418 = vadd.f32 0.0, %v417
    %v419 = vpop.f32.mrf.mxu0
    %v420 = vadd.f32 0.0, %v419
    %421 = vmatmul.bf16.gmra.mxu0 %v216
    %v422 = vpop.f32.mrf.mxu0
    %v423 = vadd.f32 0.0, %v422
    %v424 = vpop.f32.mrf.mxu0
    %v425 = vadd.f32 0.0, %v424
    %426 = vmatmul.bf16.gmra.mxu0 %v217
    %v427 = vpop.f32.mrf.mxu0
    %v428 = vadd.f32 0.0, %v427
    %v429 = vpop.f32.mrf.mxu0
    %v430 = vadd.f32 0.0, %v429
    %431 = vmatmul.bf16.gmra.mxu0 %v218
    %v432 = vpop.f32.mrf.mxu0
    %v433 = vadd.f32 0.0, %v432
    %v434 = vpop.f32.mrf.mxu0
    %435 = vdwg.mxu0
    %v436 = vld [vmem:[%s2] sm:$0x1]
    %v437 = vpack.c.bf16 %v322, %v320
    %v438 = vpack.c.bf16 %v327, %v325
    %v439 = vpack.c.bf16 %v332, %v330
    %v440 = vpack.c.bf16 %v337, %v335
    %v441 = vpack.c.bf16 %v342, %v340
    %v442 = vpack.c.bf16 %v347, %v345
    %v443 = vpack.c.bf16 %v352, %v350
    %v444 = vpack.c.bf16 %v357, %v355
    %v445 = vpack.c.bf16 %v362, %v360
    %v446 = vpack.c.bf16 %v367, %v365
    %v447 = vpack.c.bf16 %v370, %v370
    %448 = vmatpush.bf16.xpose.msra.mxu0 %v444
    %449 = vmatpush.bf16.xpose.msra.mxu0 %v443
    %450 = vmatpush.bf16.xpose.msra.mxu0 %v442
    %451 = vmatpush.bf16.xpose.msra.mxu0 %v441
    %452 = vmatpush.bf16.xpose.msra.mxu0 %v440
    %453 = vmatpush.bf16.xpose.msra.mxu0 %v439
    %454 = vmatpush.bf16.xpose.msra.mxu0 %v438
    %455 = vmatpush.bf16.xpose.msra.mxu0 %v437
    %456 = vmatmul.bf16.gmra.mxu0 %v436
    %v457 = vpop.f32.mrf.mxu0
    %v458 = vadd.f32 0.0, %v457
    %v459 = vpop.f32.mrf.mxu0
    %460 = vdwg.mxu0
    %461 = vmatpush.bf16.xpose.msra.mxu0 0
    %462 = vmatpush.bf16.xpose.msra.mxu0 0
    %463 = vmatpush.bf16.xpose.msra.mxu0 0
    %464 = vmatpush.bf16.xpose.msra.mxu0 0
    %465 = vmatpush.bf16.xpose.msra.mxu0 0
    %466 = vmatpush.bf16.xpose.msra.mxu0 %v447
    %467 = vmatpush.bf16.xpose.msra.mxu0 %v446
    %468 = vmatpush.bf16.xpose.msra.mxu0 %v445
    %469 = vmatmul.bf16.gmra.mxu0 %v436
    %v470 = vpop.f32.mrf.mxu0
    %v471 = vadd.f32 0.0, %v470
    %v472 = vpop.f32.mrf.mxu0
    %473 = vdwg.mxu0
    %v474 = vlaneseq
    %v475 = vshrl.u32 %v474, 7
    %v476 = vadd.s32 %v475, 8
    %v477 = vadd.s32 %v475, 16
    %v478 = vlaneseq
    %v479 = vand.u32 %v478, 127
    %v480 = vadd.s32 %v479, 128
    %v481 = vmul.u32 %v475, 7
    %v482 = vmul.u32 %v476, 7
    %v483 = vmul.u32 %v477, 7
    %vm484 = vcmp.ge.s32.totalorder %v479, %v481
    %vm485 = vcmp.ge.s32.totalorder %v480, %v481
    %vm486 = vcmp.ge.s32.totalorder %v479, %v482
    %vm487 = vcmp.ge.s32.totalorder %v480, %v482
    %vm488 = vcmp.ge.s32.totalorder %v479, %v483
    %vm489 = vcmp.ge.s32.totalorder %v480, %v483
    %v490 = vadd.s32 %v481, 7
    %v491 = vadd.s32 %v482, 7
    %v492 = vadd.s32 %v483, 7
    %vm493 = vcmp.lt.s32.totalorder %v479, %v490
    %vm494 = vcmp.lt.s32.totalorder %v480, %v490
    %vm495 = vcmp.lt.s32.totalorder %v479, %v491
    %vm496 = vcmp.lt.s32.totalorder %v480, %v491
    %vm497 = vcmp.lt.s32.totalorder %v479, %v492
    %vm498 = vcmp.lt.s32.totalorder %v480, %v492
    %vm499 = vmand %vm484, %vm493
    %vm500 = vmand %vm485, %vm494
    %vm501 = vmand %vm486, %vm495
    %vm502 = vmand %vm487, %vm496
    %vm503 = vmand %vm488, %vm497
    %vm504 = vmand %vm489, %vm498
    %v505 = vld [vmem:[#allocation6] sm:$0x3]
    %vm506 = vcmp.gt.f32.partialorder %v505, 0.0
    %v507 = vsel %vm506, 1, 0
    %v508 = vperm.slane %v507, 0
    %v509 = vperm.slane %v507, 1
    %vm510 = vcmp.eq.s32.totalorder %v508, 1
    %vm511 = vcmp.eq.s32.totalorder %v509, 1
    %vm512 = vmand %vm499, %vm510
    %vm513 = vmand %vm500, %vm511
    %vm514 = vmand %vm501, %vm510
    %vm515 = vmand %vm502, %vm511
    %vm516 = vmand %vm503, %vm510
    %vm517 = vmand %vm504, %vm511
    %v518 = vperm.slane %v458, 0
    %v519 = vperm.slane %v471, 0
    %v520 = vsel %vm512, %v518, -1e+09
    %v521 = vsel %vm513, %v519, -1e+09
    %v522 = vsel %vm514, %v518, -1e+09
    %v523 = vsel %vm515, %v519, -1e+09
    %v524 = vsel %vm516, %v518, -1e+09
    %v525 = vsel %vm517, %v519, -1e+09
    %s526 = sld [smem:[#allocation12]]
    %vm527 = vcmask 326656
    %v528 = vsel %vm527, %v521, -inf
    %v529 = vmax.f32 %v520, %v528
    %530 = vmax.xlane.f32.xlu0 %v529
    %v531 = vpop.xlane.xlu0 %530
    %v532 = vsel %vm527, %v523, -inf
    %v533 = vmax.f32 %v522, %v532
    %534 = vmax.xlane.f32.xlu0 %v533
    %v535 = vpop.xlane.xlu0 %534
    %v536 = vsel %vm527, %v525, -inf
    %v537 = vmax.f32 %v524, %v536
    %538 = vmax.xlane.f32.xlu0 %v537
    %v539 = vpop.xlane.xlu0 %538
    %v540 = vstv %s526
    %v541 = vmax.f32 %v531, %v540
    %v542 = vmax.f32 %v535, %v540
    %v543 = vmax.f32 %v539, %v540
    %v544 = vsub.f32 %v520, %v541
    %v545 = vsub.f32 %v521, %v541
    %v546 = vsub.f32 %v522, %v542
    %v547 = vsub.f32 %v523, %v542
    %v548 = vsub.f32 %v524, %v543
    %v549 = vsub.f32 %v525, %v543
    %v550 = vmul.f32 %v544, 1.442695
    %v551 = vpow.pop %v550
    %v552 = vmul.f32 %v545, 1.442695
    %v553 = vpow.pop %v552
    %v554 = vmul.f32 %v546, 1.442695
    %v555 = vpow.pop %v554
    %v556 = vmul.f32 %v547, 1.442695
    %v557 = vpow.pop %v556
    %v558 = vmul.f32 %v548, 1.442695
    %v559 = vpow.pop %v558
    %v560 = vmul.f32 %v549, 1.442695
    %v561 = vpow.pop %v560
    %v562 = vsub.f32 %v540, %v541
    %v563 = vsub.f32 %v540, %v542
    %v564 = vsub.f32 %v540, %v543
    %v565 = vmul.f32 %v562, 1.442695
    %v566 = vpow.pop %v565
    %v567 = vmul.f32 %v563, 1.442695
    %v568 = vpow.pop %v567
    %v569 = vmul.f32 %v564, 1.442695
    %v570 = vpow.pop %v569
    %v571 = vsel %vm527, %v553, 0.0
    %v572 = vadd.f32 %v551, %v571
    %573 = vadd.xlane.f32.xlu0 %v572
    %v574 = vpop.xlane.xlu0 %573
    %v575 = vsel %vm527, %v557, 0.0
    %v576 = vadd.f32 %v555, %v575
    %577 = vadd.xlane.f32.xlu0 %v576
    %v578 = vpop.xlane.xlu0 %577
    %v579 = vsel %vm527, %v561, 0.0
    %v580 = vadd.f32 %v559, %v579
    %581 = vadd.xlane.f32.xlu0 %v580
    %v582 = vpop.xlane.xlu0 %581
    %v583 = vadd.f32 %v574, %v566
    %v584 = vadd.f32 %v578, %v568
    %v585 = vadd.f32 %v582, %v570
    %v586 = vpack.c.bf16 %v555, %v551
    %v587 = vpack.c.bf16 %v557, %v553
    %v588 = vpack.c.bf16 %v559, %v559
    %v589 = vpack.c.bf16 %v561, %v561
    %v590 = vpack.c.bf16 %v385, %v383
    %v591 = vpack.c.bf16 %v390, %v388
    %v592 = vpack.c.bf16 %v395, %v393
    %v593 = vpack.c.bf16 %v400, %v398
    %v594 = vpack.c.bf16 %v405, %v403
    %v595 = vpack.c.bf16 %v410, %v408
    %v596 = vpack.c.bf16 %v415, %v413
    %v597 = vpack.c.bf16 %v420, %v418
    %v598 = vpack.c.bf16 %v425, %v423
    %v599 = vpack.c.bf16 %v430, %v428
    %v600 = vpack.c.bf16 %v433, %v433
    %v601 = vld [vmem:[%s3] sm:$0x1]
    %v603 = vperm.slane %v601, 0
    %v605 = vmul.f32 %v566, %v603
    %v606 = vmul.f32 %v568, %v603
    %v607 = vmul.f32 %v570, %v603
    %v609 = vsel %vm527, %v587, 0
    %v612 = vsel %vm527, %v589, 0
    %vm614 = vcmask 1043456
    %v616 = vsel %vm614, %v600, 0
    %618 = vmatpush.bf16.msra.mxu0 %v597
    %619 = vmatpush.bf16.msra.mxu0 %v596
    %620 = vmatpush.bf16.msra.mxu0 %v595
    %621 = vmatpush.bf16.msra.mxu0 %v594
    %622 = vmatpush.bf16.msra.mxu0 %v593
    %623 = vmatpush.bf16.msra.mxu0 %v592
    %624 = vmatpush.bf16.msra.mxu0 %v591
    %625 = vmatpush.bf16.msra.mxu0 %v590
    %626 = vmatmul.bf16.gmra.mxu0 %v586
    %v627 = vpop.f32.mrf.mxu0
    %v628 = vadd.f32 %v605, %v627
    %v629 = vpop.f32.mrf.mxu0
    %v630 = vadd.f32 %v606, %v629
    %631 = vmatmul.bf16.gmra.mxu0 %v588
    %v632 = vpop.f32.mrf.mxu0
    %v633 = vadd.f32 %v607, %v632
    %v634 = vpop.f32.mrf.mxu0
    %635 = vdwg.mxu0
    %636 = vmatpush.bf16.msra.mxu0 0
    %637 = vmatpush.bf16.msra.mxu0 0
    %638 = vmatpush.bf16.msra.mxu0 0
    %639 = vmatpush.bf16.msra.mxu0 0
    %640 = vmatpush.bf16.msra.mxu0 0
    %641 = vmatpush.bf16.msra.mxu0 %v616
    %642 = vmatpush.bf16.msra.mxu0 %v599
    %643 = vmatpush.bf16.msra.mxu0 %v598
    %644 = vmatmul.bf16.gmra.mxu0 %v609
    %v645 = vpop.f32.mrf.mxu0
    %v646 = vadd.f32 %v628, %v645
    %v647 = vpop.f32.mrf.mxu0
    %v648 = vadd.f32 %v630, %v647
    %649 = vmatmul.bf16.gmra.mxu0 %v612
    %v650 = vpop.f32.mrf.mxu0
    %v651 = vadd.f32 %v633, %v650
    %v652 = vpop.f32.mrf.mxu0
    %653 = vdwg.mxu0
    %v654 = vrcp.pop %v583
    %v655 = vrcp.pop %v584
    %v656 = vrcp.pop %v585
    %v657 = vmul.f32 %v646, %v654
    %v658 = vmul.f32 %v648, %v655
    %v659 = vmul.f32 %v651, %v656
    %v660 = vpack.c.bf16 %v658, %v657
    %v661 = vpack.c.bf16 %v659, %v659
    %v662 = vld [vmem:[#allocation9] sm:$0xf]
    %v663 = vld [vmem:[#allocation9 + $0x4] sm:$0xf]
    %v664 = vld [vmem:[#allocation9 + $0x8] sm:$0xf]
    %v665 = vld [vmem:[#allocation9 + $0xc] sm:$0xf]
    %v666 = vld [vmem:[#allocation9 + $0x10] sm:$0xf]
    %v667 = vld [vmem:[#allocation9 + $0x14] sm:$0xf]
    %v668 = vld [vmem:[#allocation9 + $0x18] sm:$0xf]
    %v669 = vld [vmem:[#allocation9 + $0x1c] sm:$0xf]
    %v670 = vld [vmem:[#allocation9 + $0x20] sm:$0xf]
    %v671 = vld [vmem:[#allocation9 + $0x24] sm:$0xf]
    %v672 = vld [vmem:[#allocation9 + $0x28] sm:$0xf]
    %v673 = vld [vmem:[#allocation9 + $0x2c] sm:$0xf]
    %v674 = vld [vmem:[#allocation9 + $0x30] sm:$0xf]
    %v675 = vld [vmem:[#allocation9 + $0x34] sm:$0xf]
    %v676 = vld [vmem:[#allocation9 + $0x38] sm:$0xf]
    %v677 = vld [vmem:[#allocation9 + $0x3c] sm:$0xf]
    %v678 = vld [vmem:[%s4] sm:$0x1]
    %v680 = vperm.slane %v678, 0
    %v698 = vunpack.c.l.b16 %v662
    %v699 = vunpack.c.l.b16 %v663
    %v700 = vunpack.c.l.b16 %v664
    %v701 = vunpack.c.l.b16 %v665
    %v702 = vunpack.c.l.b16 %v666
    %v703 = vunpack.c.l.b16 %v667
    %v704 = vunpack.c.l.b16 %v668
    %v705 = vunpack.c.l.b16 %v669
    %v706 = vunpack.c.l.b16 %v670
    %v707 = vunpack.c.l.b16 %v671
    %v708 = vunpack.c.l.b16 %v672
    %v709 = vunpack.c.l.b16 %v673
    %v710 = vunpack.c.l.b16 %v674
    %v711 = vunpack.c.l.b16 %v675
    %v712 = vunpack.c.l.b16 %v676
    %v713 = vunpack.c.l.b16 %v677
    %v714 = vpack.c.b16 %v699, %v698
    %v715 = vpack.c.b16 %v701, %v700
    %v716 = vpack.c.b16 %v703, %v702
    %v717 = vpack.c.b16 %v705, %v704
    %v718 = vpack.c.b16 %v707, %v706
    %v719 = vpack.c.b16 %v709, %v708
    %v720 = vpack.c.b16 %v711, %v710
    %v721 = vpack.c.b16 %v713, %v712
    %730 = vmatpush.bf16.msra.mxu0 %v721
    %731 = vmatpush.bf16.msra.mxu0 %v720
    %732 = vmatpush.bf16.msra.mxu0 %v719
    %733 = vmatpush.bf16.msra.mxu0 %v718
    %734 = vmatpush.bf16.msra.mxu0 %v717
    %735 = vmatpush.bf16.msra.mxu0 %v716
    %736 = vmatpush.bf16.msra.mxu0 %v715
    %737 = vmatpush.bf16.msra.mxu0 %v714
    %738 = vmatmul.bf16.gmra.mxu0 %v660
    %v739 = vpop.f32.mrf.mxu0
    %v740 = vadd.f32 %v680, %v739
    %v741 = vpop.f32.mrf.mxu0
    %v742 = vadd.f32 %v680, %v741
    %743 = vmatmul.bf16.gmra.mxu0 %v661
    %v744 = vpop.f32.mrf.mxu0
    %v745 = vadd.f32 %v680, %v744
    %v746 = vpop.f32.mrf.mxu0
    %747 = vdwg.mxu0
    %v748 = vpack.c.bf16 %v742, %v740
    %v749 = vpack.c.bf16 %v745, %v745
    %v750 = vld [vmem:[#allocation11] sm:$0xf]
    %v751 = vld [vmem:[#allocation11 + $0x4] sm:$0xf]
    %v752 = vld [vmem:[#allocation11 + $0x8] sm:$0xf]
    %v753 = vld [vmem:[#allocation11 + $0xc] sm:$0xf]
    %v754 = vld [vmem:[#allocation11 + $0x10] sm:$0xf]
    %v755 = vld [vmem:[#allocation11 + $0x14] sm:$0xf]
    %v756 = vld [vmem:[#allocation11 + $0x18] sm:$0xf]
    %v757 = vld [vmem:[#allocation11 + $0x1c] sm:$0xf]
    %v758 = vld [vmem:[#allocation11 + $0x20] sm:$0xf]
    %v759 = vld [vmem:[#allocation11 + $0x24] sm:$0xf]
    %v760 = vld [vmem:[#allocation11 + $0x28] sm:$0xf]
    %v761 = vld [vmem:[#allocation11 + $0x2c] sm:$0xf]
    %v762 = vld [vmem:[#allocation11 + $0x30] sm:$0xf]
    %v763 = vld [vmem:[#allocation11 + $0x34] sm:$0xf]
    %v764 = vld [vmem:[#allocation11 + $0x38] sm:$0xf]
    %v765 = vld [vmem:[#allocation11 + $0x3c] sm:$0xf]
    %v782 = vunpack.c.l.b16 %v750
    %v783 = vunpack.c.l.b16 %v751
    %v784 = vunpack.c.l.b16 %v752
    %v785 = vunpack.c.l.b16 %v753
    %v786 = vunpack.c.l.b16 %v754
    %v787 = vunpack.c.l.b16 %v755
    %v788 = vunpack.c.l.b16 %v756
    %v789 = vunpack.c.l.b16 %v757
    %v790 = vunpack.c.l.b16 %v758
    %v791 = vunpack.c.l.b16 %v759
    %v792 = vunpack.c.l.b16 %v760
    %v793 = vunpack.c.l.b16 %v761
    %v794 = vunpack.c.l.b16 %v762
    %v795 = vunpack.c.l.b16 %v763
    %v796 = vunpack.c.l.b16 %v764
    %v797 = vunpack.c.l.b16 %v765
    %v798 = vpack.c.b16 %v783, %v782
    %v799 = vpack.c.b16 %v785, %v784
    %v800 = vpack.c.b16 %v787, %v786
    %v801 = vpack.c.b16 %v789, %v788
    %v802 = vpack.c.b16 %v791, %v790
    %v803 = vpack.c.b16 %v793, %v792
    %v804 = vpack.c.b16 %v795, %v794
    %v805 = vpack.c.b16 %v797, %v796
    %814 = vmatpush.bf16.msra.mxu0 %v805
    %815 = vmatpush.bf16.msra.mxu0 %v804
    %816 = vmatpush.bf16.msra.mxu0 %v803
    %817 = vmatpush.bf16.msra.mxu0 %v802
    %818 = vmatpush.bf16.msra.mxu0 %v801
    %819 = vmatpush.bf16.msra.mxu0 %v800
    %820 = vmatpush.bf16.msra.mxu0 %v799
    %821 = vmatpush.bf16.msra.mxu0 %v798
    %822 = vmatmul.bf16.gmra.mxu0 %v748
    %v823 = vpop.f32.mrf.mxu0
    %v824 = vadd.f32 0.0, %v823
    %v825 = vpop.f32.mrf.mxu0
    %v826 = vadd.f32 0.0, %v825
    %827 = vmatmul.bf16.gmra.mxu0 %v749
    %v828 = vpop.f32.mrf.mxu0
    %v829 = vadd.f32 0.0, %v828
    %v830 = vpop.f32.mrf.mxu0
    %831 = vdwg.mxu0
    %v832 = vmul.f32 %v824, %v824
    %v833 = vmul.f32 %v826, %v826
    %v834 = vmul.f32 %v829, %v829
    %v835 = vmul.f32 %v824, %v832
    %v836 = vmul.f32 %v826, %v833
    %v837 = vmul.f32 %v829, %v834
    %v838 = vmul.f32 %v835, 0.044715
    %v839 = vmul.f32 %v836, 0.044715
    %v840 = vmul.f32 %v837, 0.044715
    %v841 = vadd.f32 %v824, %v838
    %v842 = vadd.f32 %v826, %v839
    %v843 = vadd.f32 %v829, %v840
    %v844 = vmul.f32 %v841, 0.7978846
    %v845 = vmul.f32 %v842, 0.7978846
    %v846 = vmul.f32 %v843, 0.7978846
    %v847 = vtanh.pop %v844
    %v848 = vtanh.pop %v845
    %v849 = vtanh.pop %v846
    %v850 = vadd.f32 %v847, 1.0
    %v851 = vadd.f32 %v848, 1.0
    %v852 = vadd.f32 %v849, 1.0
    %v853 = vmul.f32 %v850, 0.5
    %v854 = vmul.f32 %v851, 0.5
    %v855 = vmul.f32 %v852, 0.5
    %v856 = vmul.f32 %v824, %v853
    %v857 = vmul.f32 %v826, %v854
    %v858 = vmul.f32 %v829, %v855
    %v859 = vld [vmem:[%s8] sm:$0x1]
    %v860 = vpack.c.bf16 %v857, %v856
    %v861 = vpack.c.bf16 %v858, %v858
    %v862 = vld [vmem:[%s9] sm:$0x1]
    %863 = vmatpush.bf16.xpose.msra.mxu0 0
    %864 = vmatpush.bf16.xpose.msra.mxu0 0
    %865 = vmatpush.bf16.xpose.msra.mxu0 0
    %866 = vmatpush.bf16.xpose.msra.mxu0 0
    %867 = vmatpush.bf16.xpose.msra.mxu0 0
    %868 = vmatpush.bf16.xpose.msra.mxu0 0
    %869 = vmatpush.bf16.xpose.msra.mxu0 %v749
    %870 = vmatpush.bf16.xpose.msra.mxu0 %v748
    %871 = vmatmul.bf16.gmra.mxu0 %v862
    %v872 = vpop.f32.mrf.mxu0
    %v873 = vadd.f32 0.0, %v872
    %v874 = vpop.f32.mrf.mxu0
    %875 = vdwg.mxu0
    %876 = vmatpush.bf16.xpose.msra.mxu0 0
    %877 = vmatpush.bf16.xpose.msra.mxu0 0
    %878 = vmatpush.bf16.xpose.msra.mxu0 0
    %879 = vmatpush.bf16.xpose.msra.mxu0 0
    %880 = vmatpush.bf16.xpose.msra.mxu0 0
    %881 = vmatpush.bf16.xpose.msra.mxu0 0
    %882 = vmatpush.bf16.xpose.msra.mxu0 %v861
    %883 = vmatpush.bf16.xpose.msra.mxu0 %v860
    %884 = vmatmul.bf16.gmra.mxu0 %v859
    %v885 = vpop.f32.mrf.mxu0
    %v886 = vadd.f32 %v873, %v885
    %v887 = vpop.f32.mrf.mxu0
    %888 = vdwg.mxu0
    %s889 = sld [smem:[#allocation12 + $0x1]]
    %v890 = vstv %s889
    %v891 = vadd.f32 %v886, %v890
    %vm892 = vcmask 188416
    %893 = vst.msk [vmem:[#allocation13] sm:$0x1] %vm892, %v891
    // Predicated region
    $region70: #{tpu_custom_call.1} parent=1 // pred_check
      _
    $region71: #{tpu_custom_call.1} parent=1 // pred_check_branch
      %895 = sbr.rel (0) target = $region73
    $region72: #{tpu_custom_call.1} parent=1 // pred_region
      %897 = vsyncadd [#allocation4], 0
      %s899 = sshll.u32 [#allocation13], 4
      %s900 = int_to_ptr.vmem [resolvable:$true] %s899
      %s901 = sshll.u32 %s11, 4
      %s902 = int_to_ptr.hbm [resolvable:$true] %s901
      %904 = dma.vmem_to_hbm [thread:$0]  %s900, 16, %s902, [#allocation4]
    $region73: #{tpu_custom_call.1} parent=1 // pred_fallthru
      _
    // Predicated region
    $region74: #{tpu_custom_call.1} parent=1 // pred_check
      _
    $region75: #{tpu_custom_call.1} parent=1 // pred_check_branch
      %906 = sbr.rel (0) target = $region77
    $region76: #{tpu_custom_call.1} parent=1 // pred_region
      %908 = dma.done [#allocation4], 16
    $region77: #{tpu_custom_call.1} parent=1 // pred_fallthru
      _
    %909 = vsyncpa [#allocation3], 1
    %910 = vsyncpa [#allocation7], 1
    %911 = vsyncpa [#allocation10], 1
    %912 = vsyncpa [#allocation4], 1
    %913 = vsyncpa [#allocation5], 1

</llo_original>
